<compile_context>
chip_gen: v7x
topology: tpu7x:2x2x1
jax: 0.10.0
libtpu: 0.0.40
codegen_flags: <defaults>
</compile_context>

<pallas_src>
import functools

import jax
import jax.numpy as jnp
from jax.experimental import pallas as pl
from jax.experimental.pallas import tpu as pltpu


_DEFAULT_VMEM_CAP = 64 << 20   # assume the smallest (v7x-class) VMEM if query fails


def _vmem_capacity_bytes():
    try:
        return int(pltpu.get_tpu_info().vmem_capacity_bytes)
    except Exception:
        return _DEFAULT_VMEM_CAP


def _normalize_kernel_p2(x_ref, o_ref):
    x = x_ref[...]
    xf = x if x.dtype == jnp.float32 else x.astype(jnp.float32)
    sumsq = jnp.sum(xf * xf, axis=-1, keepdims=True)   # XLU cross-lane reduce
    inv = jax.lax.rsqrt(sumsq)                         # EUP, one per row
    if x.dtype == jnp.float32:
        o_ref[...] = xf * inv
    else:
        # Final scale in the storage dtype (bf16 VPU on v6e/v7x): halves the
        # live f32 footprint so large tiles still fit v7x's 64 MiB VMEM.
        o_ref[...] = (x * inv.astype(x.dtype)).astype(o_ref.dtype)


def _normalize_kernel_generic(x_ref, o_ref, *, power):
    # Literal module math: sum(x**p) ** (1/p)  (no abs, no eps).
    x = x_ref[...]
    xf = x if x.dtype == jnp.float32 else x.astype(jnp.float32)
    if isinstance(power, int):
        xp = xf if power == 1 else xf ** power          # lax.integer_pow -> VPU muls
    else:
        xp = xf ** jnp.float32(power)                   # EUP exp/log (non-integer p)
    norm = jnp.sum(xp, axis=-1, keepdims=True)
    if isinstance(power, int) and power == 1:
        inv = 1.0 / norm                                # one per-row divide
    else:
        inv = norm ** jnp.float32(-1.0 / power)         # one per-row pow
    o_ref[...] = (xf * inv).astype(o_ref.dtype)


def _choose_tile_rows(batch, feat, itemsize, vmem_cap, target_bytes=4 << 20):
    """Row tile that streams HBM efficiently, fits VMEM, and keeps >=4 blocks."""
    pack = 8 if itemsize >= 4 else 16            # sublane packing (f32 / bf16)
    in_row = feat * itemsize
    f32_row = feat * 4
    # Live bytes per grid step: double-buffered input + output plus ~2 f32
    # intermediate tiles used by the reduction / scaling math.
    per_row = 4 * in_row + 2 * f32_row
    budget = min(int(vmem_cap * 0.6), 48 << 20)  # leave headroom for compiler temps
    if pack * per_row > budget:
        # TODO(synk): add a feature-axis grid split (per-row partial-sum scratch,
        # reduction axis last, + second scaling pass) for very wide feature dims.
        raise ValueError(
            f"feature dim {feat} too wide for a single-block row reduction "
            f"(needs {pack * per_row} bytes of VMEM, budget {budget})")
    rows = min(target_bytes // max(in_row, 1), budget // per_row)
    rows = max(pack, (rows // pack) * pack)
    # Keep >=4 (else >=2) grid blocks when the batch allows it, so "parallel"
    # sharding can use both TensorCores on v7x (neutral on v5e/v6e).
    for nblocks in (4, 2):
        cap = (batch // nblocks) // pack * pack
        if cap >= pack:
            rows = min(rows, cap)
            break
    if rows >= batch:
        rows = batch     # single full-extent row block (exempt from the /8 rule)
    return rows


def normalize(x, power=2, *, tile_rows=None):
    """Lp normalization along axis 1 of a (batch, features) array."""
    B, D = x.shape
    itemsize = jnp.dtype(x.dtype).itemsize
    vmem_cap = _vmem_capacity_bytes()
    if tile_rows is None:
        tile_rows = _choose_tile_rows(B, D, itemsize, vmem_cap)

    if power == 2:
        kernel = _normalize_kernel_p2
    else:
        kernel = functools.partial(_normalize_kernel_generic, power=power)

    # VMEM budget: double-buffered in + out tiles plus f32 intermediates,
    # clamped under the physical capacity with headroom (v7x: 64 MiB per TC).
    tile_in = tile_rows * D * itemsize
    tile_f32 = tile_rows * D * 4
    working = 4 * tile_in + 2 * tile_f32 + (2 << 20)
    vmem_bytes = int(min(max(working, 16 << 20), int(vmem_cap * 0.7)))

    grid = (pl.cdiv(B, tile_rows),)   # edge block: garbage rows computed, never stored
    return pl.pallas_call(
        kernel,
        out_shape=jax.ShapeDtypeStruct((B, D), x.dtype),
        grid_spec=pltpu.PrefetchScalarGridSpec(
            num_scalar_prefetch=0,
            grid=grid,
            in_specs=[pl.BlockSpec((tile_rows, D), lambda i: (i, 0))],
            out_specs=pl.BlockSpec((tile_rows, D), lambda i: (i, 0)),
        ),
        compiler_params=pltpu.CompilerParams(
            dimension_semantics=("parallel",),
            vmem_limit_bytes=vmem_bytes,
        ),
    )(x)


def _ref_normalize(x, power=2):
    xf = x.astype(jnp.float32)
    norm = jnp.sum(xf ** power, axis=1, keepdims=True) ** (1.0 / power)
    return (xf / norm).astype(x.dtype)


if __name__ == "__main__":
    key = jax.random.PRNGKey(0)
    k1, k2, k3, k4 = jax.random.split(key, 4)

    # Case 1: aligned f32 batch (p=2 fast path).
    x1 = jax.random.normal(k1, (8, 128), dtype=jnp.float32)
    y1 = jax.block_until_ready(normalize(x1, power=2))
    assert jnp.allclose(y1, _ref_normalize(x1), atol=1e-5, rtol=1e-5), "f32 aligned mismatch"

    # Case 2: ragged shapes — partial edge row block + non-128 feature dim,
    # handled entirely in-kernel (no jnp.pad, no output slice).
    x2 = jax.random.normal(k2, (20, 96), dtype=jnp.float32)
    y2 = jax.block_until_ready(normalize(x2, power=2))
    assert jnp.allclose(y2, _ref_normalize(x2), atol=1e-5, rtol=1e-5), "f32 ragged mismatch"

    # Case 3: bf16 input (16-row sublane packing, bf16 final scale).
    x3 = jax.random.normal(k3, (16, 256), dtype=jnp.bfloat16)
    y3 = jax.block_until_ready(normalize(x3, power=2))
    ref3 = _ref_normalize(x3.astype(jnp.float32)).astype(jnp.bfloat16)
    assert jnp.allclose(y3.astype(jnp.float32), ref3.astype(jnp.float32),
                        atol=2e-2, rtol=2e-2), "bf16 mismatch"

    # Case 4: generic integer power (p=3, VPU integer_pow path). Positive inputs
    # keep the literal-module math (no abs) well defined.
    x4 = jnp.abs(jax.random.normal(k4, (8, 64), dtype=jnp.float32)) + 0.1
    y4 = jax.block_until_ready(normalize(x4, power=3))
    assert jnp.allclose(y4, _ref_normalize(x4, power=3), atol=1e-4, rtol=1e-4), "p=3 mismatch"

    print("KERNEL_OK")
</pallas_src>

<mosaic_0001>
module attributes {stable_mosaic.version = 11 : i64} {
  func.func @_normalize_kernel_p2(%arg0: i32, %arg1: memref<8x128xf32, #tpu.memory_space<vmem>>, %arg2: memref<8x128xf32, #tpu.memory_space<vmem>>) attributes {dimension_semantics = [#tpu.dimension_semantics<parallel>], iteration_bounds = array<i64: 1>, scalar_prefetch = 0 : i64, scratch_operands = 0 : i64, tpu.core_type = #tpu.core_type<tc>, window_params = [{transform_indices = @transform_0, window_bounds = array<i64: 8, 128>}, {transform_indices = @transform_1, window_bounds = array<i64: 8, 128>}]} {
    %c0 = arith.constant 0 : index
    %c0_0 = arith.constant 0 : index
    %0 = vector.load %arg1[%c0, %c0_0] : memref<8x128xf32, #tpu.memory_space<vmem>>, vector<8x128xf32>
    %1 = arith.mulf %0, %0 : vector<8x128xf32>
    %cst = arith.constant dense<0.000000e+00> : vector<8xf32>
    %2 = vector.multi_reduction <add>, %1, %cst [1] : vector<8x128xf32> to vector<8xf32>
    %3 = vector.shape_cast %2 : vector<8xf32> to vector<8x1xf32>
    %4 = math.rsqrt %3 : vector<8x1xf32>
    %5 = vector.broadcast %4 : vector<8x1xf32> to vector<8x128xf32>
    %6 = arith.mulf %0, %5 : vector<8x128xf32>
    %c0_1 = arith.constant 0 : index
    %c0_2 = arith.constant 0 : index
    %7 = vector.load %arg2[%c0_1, %c0_2] : memref<8x128xf32, #tpu.memory_space<vmem>>, vector<8x128xf32>
    tpu.vector_store %arg2[%c0_1, %c0_2], %6 {strides = array<i32>} : memref<8x128xf32, #tpu.memory_space<vmem>>, vector<8x128xf32>,
    return
  }
  func.func @transform_0(%arg0: i32) -> (i32, i32) {
    %c0_i32 = arith.constant 0 : i32
    %c0_i32_0 = arith.constant 0 : i32
    return %arg0, %c0_i32 : i32, i32
  }
  func.func @transform_1(%arg0: i32) -> (i32, i32) {
    %c0_i32 = arith.constant 0 : i32
    %c0_i32_0 = arith.constant 0 : i32
    return %arg0, %c0_i32 : i32, i32
  }
}

</mosaic_0001>

<llo_original>
// kernel: tpu_custom_call.1
$region0: #{tpu_custom_call.1}
  #allocation0 [shape = 'u32[]', space=smem, size = 0x4, offset = 0x4, fixed_abs, tag = 'smem constant byte address 0x4 - core index']
  #allocation1 [shape = 'u32[144,128]{1,0:T(1,128)}', space=vmem, size = 0x12000, scoped, tag = 'internal scratch']
  %s0 = inlined_call_operand.hbm [shape: f32[8,128], index: 0, kind: input, shape index: {}]
  %s1 = inlined_call_operand.hbm [shape: f32[8,128], index: 1, kind: output, shape index: {}]
  %s2 = sld [smem:[#allocation0]]
  $region18: #{tpu_custom_call.1} parent=0
    _
  %s4 = ssub.s32 1, %s2
  %s5 = scalar_select 0, %s4, %s2
  $region1: #{tpu_custom_call.1} parent=0
    #allocation2 [shape = 'u8[4096]{0}', space=vmem, size = 0x1000, scoped, tag = 'input window, operand 0, single buffered']
    #allocation3 [shape = 's32[1]{0}', space=sflag, size = 0x4, scoped, tag = 'scoped memory for tpu_custom_call.1']
    #allocation4 [shape = 's32[1]{0}', space=sflag, size = 0x4, scoped, tag = 'scoped memory for tpu_custom_call.1']
    #allocation5 [shape = 'u8[4096]{0}', space=vmem, size = 0x1000, scoped, tag = 'output window, operand 0, single buffered']
    %6 = vsyncpa [#allocation3], 0
    %7 = vsyncpa [#allocation4], 0
    // Predicated region
    $region2: #{tpu_custom_call.1} parent=1 // pred_check
      _
    $region3: #{tpu_custom_call.1} parent=1 // pred_check_branch
      %9 = sbr.rel (0) target = $region5
    $region4: #{tpu_custom_call.1} parent=1 // pred_region
      %s11 = ssub.s32 128, 128
      %12 = vsyncadd [#allocation3], %s11
      %s14 = sshll.u32 [#allocation2], 4
      %s15 = int_to_ptr.vmem [resolvable:$true] %s14
      %17 = dma.hbm_to_vmem [thread:$0]  %s0, 128, %s15, [#allocation3]
    $region5: #{tpu_custom_call.1} parent=1 // pred_fallthru
      _
    // Predicated region
    $region6: #{tpu_custom_call.1} parent=1 // pred_check
      _
    $region7: #{tpu_custom_call.1} parent=1 // pred_check_branch
      %19 = sbr.rel (0) target = $region9
    $region8: #{tpu_custom_call.1} parent=1 // pred_region
      %20 = dma.done [#allocation3], 128
    $region9: #{tpu_custom_call.1} parent=1 // pred_fallthru
      _
    %v21 = vld [vmem:[#allocation2] sm:$0xff]
    %v22 = vmul.f32 %v21, %v21
    %23 = vadd.xlane.f32.xlu0 %v22
    %v24 = vpop.xlane.xlu0 %23
    %v25 = vrsqrt.pop %v24
    %v26 = vmul.f32 %v21, %v25
    %27 = vst [vmem:[#allocation5] sm:$0xff] %v26
    // Predicated region
    $region10: #{tpu_custom_call.1} parent=1 // pred_check
      _
    $region11: #{tpu_custom_call.1} parent=1 // pred_check_branch
      %29 = sbr.rel (0) target = $region13
    $region12: #{tpu_custom_call.1} parent=1 // pred_region
      %s31 = ssub.s32 128, 128
      %32 = vsyncadd [#allocation4], %s31
      %s34 = sshll.u32 [#allocation5], 4
      %s35 = int_to_ptr.vmem [resolvable:$true] %s34
      %37 = dma.vmem_to_hbm [thread:$0]  %s35, 128, %s1, [#allocation4]
    $region13: #{tpu_custom_call.1} parent=1 // pred_fallthru
      _
    // Predicated region
    $region14: #{tpu_custom_call.1} parent=1 // pred_check
      _
    $region15: #{tpu_custom_call.1} parent=1 // pred_check_branch
      %39 = sbr.rel (0) target = $region17
    $region16: #{tpu_custom_call.1} parent=1 // pred_region
      %40 = dma.done [#allocation4], 128
    $region17: #{tpu_custom_call.1} parent=1 // pred_fallthru
      _
    %41 = vsyncpa [#allocation3], 1
    %42 = vsyncpa [#allocation4], 1

</llo_original>
